<compile_context>
chip_gen: v7x
topology: tpu7x:2x2x1
jax: 0.10.0
libtpu: 0.0.40
codegen_flags: <defaults>
</compile_context>

<pallas_src>
import jax
import jax.numpy as jnp
from jax.experimental import pallas as pl
from jax.experimental.pallas import tpu as pltpu


_LAYER_DIMS = ((1, 5), (5, 5), (5, 5), (5, 5), (5, 5), (5, 1))  # (fan_in, fan_out)
_LANES = 128


def _round_up(x, m):
    return ((x + m - 1) // m) * m


def _make_kernel(tb, ch):
    """Build the MLP kernel for a (tb, 128) batch tile, processed in (ch, 128)
    row sub-chunks (ch in {8, 16}) to keep the live vreg working set tiny."""
    assert tb % ch == 0
    n_chunks = tb // ch
    n_layers = len(_LAYER_DIMS)

    def kernel(p_ref, t_ref, out_ref):
        # ---- Hoist ALL 136 SMEM scalar reads out of the row-chunk loop ----
        # (re-emitting them per chunk would rival the useful VPU work).
        layer_params = []
        off = 0
        for (fin, fout) in _LAYER_DIMS:
            w = [[p_ref[off + i * fout + o] for o in range(fout)]
                 for i in range(fin)]
            off += fin * fout
            b = [p_ref[off + o] for o in range(fout)]
            off += fout
            layer_params.append((w, b))

        def compute_chunk(x):
            # x: (ch, 128). Sigmoid affine is folded into (w, b): hidden layers
            # carry g = tanh(.), the output layer is a plain affine.
            feats = [x]
            for li, (fin, fout) in enumerate(_LAYER_DIMS):
                w, b = layer_params[li]
                new_feats = []
                for o in range(fout):
                    acc = feats[0] * w[0][o]                 # VPU FMAs
                    for i in range(1, fin):
                        acc = acc + feats[i] * w[i][o]
                    acc = acc + b[o]
                    if li != n_layers - 1:
                        acc = jnp.tanh(acc)                  # single EUP op
                    new_feats.append(acc)
                feats = new_feats
            return feats[0]

        if n_chunks == 1:
            out_ref[...] = compute_chunk(t_ref[...]).astype(out_ref.dtype)
        else:
            def body(c, carry):
                r0 = pl.multiple_of(c * ch, ch)
                x = t_ref[pl.ds(r0, ch), :]
                out_ref[pl.ds(r0, ch), :] = compute_chunk(x).astype(out_ref.dtype)
                return carry
            jax.lax.fori_loop(0, n_chunks, body, 0)

    return kernel


def pack_params(params):
    """Pack all (W, b) into one flat f32 vector with the sigmoid affine
    (sigmoid(x) = 0.5 * tanh(x/2) + 0.5) constant-folded in:
      layer 1   : W' = W/2 , b' = b/2                     (kernel applies tanh)
      layers 2-5: W' = W/4 , b' = b/2 + colsum(W)/4       (kernel applies tanh)
      layer 6   : W' = W/2 , b' = b   + colsum(W)/2       (kernel: affine only)
    W stored row-major as (in, out); kernel index = i * fan_out + o."""
    n = len(params)
    parts = []
    for li, (w, b) in enumerate(params):
        w = jnp.asarray(w, jnp.float32)
        b = jnp.asarray(b, jnp.float32).reshape(-1)
        if li == 0:
            w2, b2 = 0.5 * w, 0.5 * b
        elif li < n - 1:
            w2 = 0.25 * w
            b2 = 0.5 * b + 0.25 * jnp.sum(w, axis=0)
        else:
            w2 = 0.5 * w
            b2 = b + 0.5 * jnp.sum(w, axis=0)
        parts.append(w2.reshape(-1))
        parts.append(b2.reshape(-1))
    return jnp.concatenate(parts)


def pinn_forward(t, params, *, block_rows=512):
    """t: (N, 1) float32.  params: list of 6 (W, b) pairs, W: (in, out), b: (1, out)."""
    N = t.shape[0]
    packed = pack_params(params)

    block_rows = max(8, _round_up(block_rows, 8))

    # Lane-dense layout: batch flattened to (rows, 128); rows padded to x8 so
    # every tile is full-sublane (unmasked vector loads/stores).
    rows = _round_up(max(1, -(-N // _LANES)), 8)

    if rows <= 8:
        tb = rows                              # single 8-row block
    else:
        # >= 2 grid steps so a v7x megacore shards work across both
        # TensorCores; capped by block_rows (per-step VMEM stays tiny on
        # every generation, far below v7x's 64 MiB / 32 MiB scoped limit).
        tb = min(block_rows, _round_up(-(-rows // 2), 8))
    grid_steps = -(-rows // tb)
    rows_padded = grid_steps * tb

    # Inner sub-chunk: 16 rows (2 vregs / feature map) when possible, else 8.
    ch = 16 if tb % 16 == 0 else 8

    t_flat = jnp.asarray(t, jnp.float32).reshape(-1)
    n_padded = rows_padded * _LANES
    if n_padded != N:
        t_flat = jnp.pad(t_flat, (0, n_padded - N))
    t2 = t_flat.reshape(rows_padded, _LANES)

    out2 = pl.pallas_call(
        _make_kernel(tb, ch),
        out_shape=jax.ShapeDtypeStruct((rows_padded, _LANES), jnp.float32),
        grid=(grid_steps,),
        in_specs=[
            # 136 packed scalars resident in SMEM (544 B).
            pl.BlockSpec(memory_space=pltpu.MemorySpace.SMEM),
            pl.BlockSpec((tb, _LANES), lambda i: (i, 0)),    # batch tile
        ],
        out_specs=pl.BlockSpec((tb, _LANES), lambda i: (i, 0)),
        compiler_params=pltpu.CompilerParams(
            dimension_semantics=("parallel",)),
    )(packed, t2)

    return out2.reshape(-1)[:N].reshape(N, 1)


def init_params(key):
    """Deterministic init mimicking PyTorch nn.Linear default
    (U[-1/sqrt(fan_in), +1/sqrt(fan_in)]).  W stored as (in_features, out_features)."""
    params = []
    for (fan_in, fan_out) in _LAYER_DIMS:
        key, kw, kb = jax.random.split(key, 3)
        bound = 1.0 / (fan_in ** 0.5)
        w = jax.random.uniform(kw, (fan_in, fan_out), jnp.float32,
                               minval=-bound, maxval=bound)
        b = jax.random.uniform(kb, (1, fan_out), jnp.float32,
                               minval=-bound, maxval=bound)
        params.append((w, b))
    return params


def reference_forward(t, params):
    h = t
    for (w, b) in params[:-1]:
        h = jax.nn.sigmoid(h @ w + b)
    w, b = params[-1]
    return h @ w + b


if __name__ == "__main__":
    key = jax.random.PRNGKey(0)
    key, kt1, kt2 = jax.random.split(key, 3)

    params = init_params(key)

    # PINN batch of time samples (matches the 500x1 batch in the spec).
    N1 = 500
    t1 = jax.random.uniform(kt1, (N1, 1), jnp.float32)
    out1 = jax.block_until_ready(pinn_forward(t1, params))
    ref1 = reference_forward(t1, params)
    assert out1.shape == (N1, 1)
    assert jnp.allclose(out1, ref1, atol=1e-5, rtol=1e-5), "mismatch (N=500)"

    # Larger batch: exercises the multi-step parallel grid + inner chunk loop.
    N2 = 20000
    t2 = jax.random.uniform(kt2, (N2, 1), jnp.float32)
    out2 = jax.block_until_ready(pinn_forward(t2, params))
    ref2 = reference_forward(t2, params)
    assert out2.shape == (N2, 1)
    assert jnp.allclose(out2, ref2, atol=1e-5, rtol=1e-5), "mismatch (N=20000)"

    print("KERNEL_OK")
</pallas_src>

<mosaic_0001>
module attributes {stable_mosaic.version = 11 : i64} {
  func.func @kernel(%arg0: i32, %arg1: memref<136xf32, #tpu.memory_space<smem>>, %arg2: memref<8x128xf32, #tpu.memory_space<vmem>>, %arg3: memref<8x128xf32, #tpu.memory_space<vmem>>) attributes {dimension_semantics = [#tpu.dimension_semantics<parallel>], iteration_bounds = array<i64: 1>, scalar_prefetch = 0 : i64, scratch_operands = 0 : i64, tpu.core_type = #tpu.core_type<tc>, window_params = [{transform_indices = @transform_0, window_bounds = array<i64: 136>}, {transform_indices = @transform_1, window_bounds = array<i64: 8, 128>}, {transform_indices = @transform_2, window_bounds = array<i64: 8, 128>}]} {
    %c0 = arith.constant 0 : index
    %0 = memref.load %arg1[%c0] : memref<136xf32, #tpu.memory_space<smem>>
    %c1 = arith.constant 1 : index
    %1 = memref.load %arg1[%c1] : memref<136xf32, #tpu.memory_space<smem>>
    %c2 = arith.constant 2 : index
    %2 = memref.load %arg1[%c2] : memref<136xf32, #tpu.memory_space<smem>>
    %c3 = arith.constant 3 : index
    %3 = memref.load %arg1[%c3] : memref<136xf32, #tpu.memory_space<smem>>
    %c4 = arith.constant 4 : index
    %4 = memref.load %arg1[%c4] : memref<136xf32, #tpu.memory_space<smem>>
    %c5 = arith.constant 5 : index
    %5 = memref.load %arg1[%c5] : memref<136xf32, #tpu.memory_space<smem>>
    %c6 = arith.constant 6 : index
    %6 = memref.load %arg1[%c6] : memref<136xf32, #tpu.memory_space<smem>>
    %c7 = arith.constant 7 : index
    %7 = memref.load %arg1[%c7] : memref<136xf32, #tpu.memory_space<smem>>
    %c8 = arith.constant 8 : index
    %8 = memref.load %arg1[%c8] : memref<136xf32, #tpu.memory_space<smem>>
    %c9 = arith.constant 9 : index
    %9 = memref.load %arg1[%c9] : memref<136xf32, #tpu.memory_space<smem>>
    %c10 = arith.constant 10 : index
    %10 = memref.load %arg1[%c10] : memref<136xf32, #tpu.memory_space<smem>>
    %c11 = arith.constant 11 : index
    %11 = memref.load %arg1[%c11] : memref<136xf32, #tpu.memory_space<smem>>
    %c12 = arith.constant 12 : index
    %12 = memref.load %arg1[%c12] : memref<136xf32, #tpu.memory_space<smem>>
    %c13 = arith.constant 13 : index
    %13 = memref.load %arg1[%c13] : memref<136xf32, #tpu.memory_space<smem>>
    %c14 = arith.constant 14 : index
    %14 = memref.load %arg1[%c14] : memref<136xf32, #tpu.memory_space<smem>>
    %c15 = arith.constant 15 : index
    %15 = memref.load %arg1[%c15] : memref<136xf32, #tpu.memory_space<smem>>
    %c16 = arith.constant 16 : index
    %16 = memref.load %arg1[%c16] : memref<136xf32, #tpu.memory_space<smem>>
    %c17 = arith.constant 17 : index
    %17 = memref.load %arg1[%c17] : memref<136xf32, #tpu.memory_space<smem>>
    %c18 = arith.constant 18 : index
    %18 = memref.load %arg1[%c18] : memref<136xf32, #tpu.memory_space<smem>>
    %c19 = arith.constant 19 : index
    %19 = memref.load %arg1[%c19] : memref<136xf32, #tpu.memory_space<smem>>
    %c20 = arith.constant 20 : index
    %20 = memref.load %arg1[%c20] : memref<136xf32, #tpu.memory_space<smem>>
    %c21 = arith.constant 21 : index
    %21 = memref.load %arg1[%c21] : memref<136xf32, #tpu.memory_space<smem>>
    %c22 = arith.constant 22 : index
    %22 = memref.load %arg1[%c22] : memref<136xf32, #tpu.memory_space<smem>>
    %c23 = arith.constant 23 : index
    %23 = memref.load %arg1[%c23] : memref<136xf32, #tpu.memory_space<smem>>
    %c24 = arith.constant 24 : index
    %24 = memref.load %arg1[%c24] : memref<136xf32, #tpu.memory_space<smem>>
    %c25 = arith.constant 25 : index
    %25 = memref.load %arg1[%c25] : memref<136xf32, #tpu.memory_space<smem>>
    %c26 = arith.constant 26 : index
    %26 = memref.load %arg1[%c26] : memref<136xf32, #tpu.memory_space<smem>>
    %c27 = arith.constant 27 : index
    %27 = memref.load %arg1[%c27] : memref<136xf32, #tpu.memory_space<smem>>
    %c28 = arith.constant 28 : index
    %28 = memref.load %arg1[%c28] : memref<136xf32, #tpu.memory_space<smem>>
    %c29 = arith.constant 29 : index
    %29 = memref.load %arg1[%c29] : memref<136xf32, #tpu.memory_space<smem>>
    %c30 = arith.constant 30 : index
    %30 = memref.load %arg1[%c30] : memref<136xf32, #tpu.memory_space<smem>>
    %c31 = arith.constant 31 : index
    %31 = memref.load %arg1[%c31] : memref<136xf32, #tpu.memory_space<smem>>
    %c32 = arith.constant 32 : index
    %32 = memref.load %arg1[%c32] : memref<136xf32, #tpu.memory_space<smem>>
    %c33 = arith.constant 33 : index
    %33 = memref.load %arg1[%c33] : memref<136xf32, #tpu.memory_space<smem>>
    %c34 = arith.constant 34 : index
    %34 = memref.load %arg1[%c34] : memref<136xf32, #tpu.memory_space<smem>>
    %c35 = arith.constant 35 : index
    %35 = memref.load %arg1[%c35] : memref<136xf32, #tpu.memory_space<smem>>
    %c36 = arith.constant 36 : index
    %36 = memref.load %arg1[%c36] : memref<136xf32, #tpu.memory_space<smem>>
    %c37 = arith.constant 37 : index
    %37 = memref.load %arg1[%c37] : memref<136xf32, #tpu.memory_space<smem>>
    %c38 = arith.constant 38 : index
    %38 = memref.load %arg1[%c38] : memref<136xf32, #tpu.memory_space<smem>>
    %c39 = arith.constant 39 : index
    %39 = memref.load %arg1[%c39] : memref<136xf32, #tpu.memory_space<smem>>
    %c40 = arith.constant 40 : index
    %40 = memref.load %arg1[%c40] : memref<136xf32, #tpu.memory_space<smem>>
    %c41 = arith.constant 41 : index
    %41 = memref.load %arg1[%c41] : memref<136xf32, #tpu.memory_space<smem>>
    %c42 = arith.constant 42 : index
    %42 = memref.load %arg1[%c42] : memref<136xf32, #tpu.memory_space<smem>>
    %c43 = arith.constant 43 : index
    %43 = memref.load %arg1[%c43] : memref<136xf32, #tpu.memory_space<smem>>
    %c44 = arith.constant 44 : index
    %44 = memref.load %arg1[%c44] : memref<136xf32, #tpu.memory_space<smem>>
    %c45 = arith.constant 45 : index
    %45 = memref.load %arg1[%c45] : memref<136xf32, #tpu.memory_space<smem>>
    %c46 = arith.constant 46 : index
    %46 = memref.load %arg1[%c46] : memref<136xf32, #tpu.memory_space<smem>>
    %c47 = arith.constant 47 : index
    %47 = memref.load %arg1[%c47] : memref<136xf32, #tpu.memory_space<smem>>
    %c48 = arith.constant 48 : index
    %48 = memref.load %arg1[%c48] : memref<136xf32, #tpu.memory_space<smem>>
    %c49 = arith.constant 49 : index
    %49 = memref.load %arg1[%c49] : memref<136xf32, #tpu.memory_space<smem>>
    %c50 = arith.constant 50 : index
    %50 = memref.load %arg1[%c50] : memref<136xf32, #tpu.memory_space<smem>>
    %c51 = arith.constant 51 : index
    %51 = memref.load %arg1[%c51] : memref<136xf32, #tpu.memory_space<smem>>
    %c52 = arith.constant 52 : index
    %52 = memref.load %arg1[%c52] : memref<136xf32, #tpu.memory_space<smem>>
    %c53 = arith.constant 53 : index
    %53 = memref.load %arg1[%c53] : memref<136xf32, #tpu.memory_space<smem>>
    %c54 = arith.constant 54 : index
    %54 = memref.load %arg1[%c54] : memref<136xf32, #tpu.memory_space<smem>>
    %c55 = arith.constant 55 : index
    %55 = memref.load %arg1[%c55] : memref<136xf32, #tpu.memory_space<smem>>
    %c56 = arith.constant 56 : index
    %56 = memref.load %arg1[%c56] : memref<136xf32, #tpu.memory_space<smem>>
    %c57 = arith.constant 57 : index
    %57 = memref.load %arg1[%c57] : memref<136xf32, #tpu.memory_space<smem>>
    %c58 = arith.constant 58 : index
    %58 = memref.load %arg1[%c58] : memref<136xf32, #tpu.memory_space<smem>>
    %c59 = arith.constant 59 : index
    %59 = memref.load %arg1[%c59] : memref<136xf32, #tpu.memory_space<smem>>
    %c60 = arith.constant 60 : index
    %60 = memref.load %arg1[%c60] : memref<136xf32, #tpu.memory_space<smem>>
    %c61 = arith.constant 61 : index
    %61 = memref.load %arg1[%c61] : memref<136xf32, #tpu.memory_space<smem>>
    %c62 = arith.constant 62 : index
    %62 = memref.load %arg1[%c62] : memref<136xf32, #tpu.memory_space<smem>>
    %c63 = arith.constant 63 : index
    %63 = memref.load %arg1[%c63] : memref<136xf32, #tpu.memory_space<smem>>
    %c64 = arith.constant 64 : index
    %64 = memref.load %arg1[%c64] : memref<136xf32, #tpu.memory_space<smem>>
    %c65 = arith.constant 65 : index
    %65 = memref.load %arg1[%c65] : memref<136xf32, #tpu.memory_space<smem>>
    %c66 = arith.constant 66 : index
    %66 = memref.load %arg1[%c66] : memref<136xf32, #tpu.memory_space<smem>>
    %c67 = arith.constant 67 : index
    %67 = memref.load %arg1[%c67] : memref<136xf32, #tpu.memory_space<smem>>
    %c68 = arith.constant 68 : index
    %68 = memref.load %arg1[%c68] : memref<136xf32, #tpu.memory_space<smem>>
    %c69 = arith.constant 69 : index
    %69 = memref.load %arg1[%c69] : memref<136xf32, #tpu.memory_space<smem>>
    %c70 = arith.constant 70 : index
    %70 = memref.load %arg1[%c70] : memref<136xf32, #tpu.memory_space<smem>>
    %c71 = arith.constant 71 : index
    %71 = memref.load %arg1[%c71] : memref<136xf32, #tpu.memory_space<smem>>
    %c72 = arith.constant 72 : index
    %72 = memref.load %arg1[%c72] : memref<136xf32, #tpu.memory_space<smem>>
    %c73 = arith.constant 73 : index
    %73 = memref.load %arg1[%c73] : memref<136xf32, #tpu.memory_space<smem>>
    %c74 = arith.constant 74 : index
    %74 = memref.load %arg1[%c74] : memref<136xf32, #tpu.memory_space<smem>>
    %c75 = arith.constant 75 : index
    %75 = memref.load %arg1[%c75] : memref<136xf32, #tpu.memory_space<smem>>
    %c76 = arith.constant 76 : index
    %76 = memref.load %arg1[%c76] : memref<136xf32, #tpu.memory_space<smem>>
    %c77 = arith.constant 77 : index
    %77 = memref.load %arg1[%c77] : memref<136xf32, #tpu.memory_space<smem>>
    %c78 = arith.constant 78 : index
    %78 = memref.load %arg1[%c78] : memref<136xf32, #tpu.memory_space<smem>>
    %c79 = arith.constant 79 : index
    %79 = memref.load %arg1[%c79] : memref<136xf32, #tpu.memory_space<smem>>
    %c80 = arith.constant 80 : index
    %80 = memref.load %arg1[%c80] : memref<136xf32, #tpu.memory_space<smem>>
    %c81 = arith.constant 81 : index
    %81 = memref.load %arg1[%c81] : memref<136xf32, #tpu.memory_space<smem>>
    %c82 = arith.constant 82 : index
    %82 = memref.load %arg1[%c82] : memref<136xf32, #tpu.memory_space<smem>>
    %c83 = arith.constant 83 : index
    %83 = memref.load %arg1[%c83] : memref<136xf32, #tpu.memory_space<smem>>
    %c84 = arith.constant 84 : index
    %84 = memref.load %arg1[%c84] : memref<136xf32, #tpu.memory_space<smem>>
    %c85 = arith.constant 85 : index
    %85 = memref.load %arg1[%c85] : memref<136xf32, #tpu.memory_space<smem>>
    %c86 = arith.constant 86 : index
    %86 = memref.load %arg1[%c86] : memref<136xf32, #tpu.memory_space<smem>>
    %c87 = arith.constant 87 : index
    %87 = memref.load %arg1[%c87] : memref<136xf32, #tpu.memory_space<smem>>
    %c88 = arith.constant 88 : index
    %88 = memref.load %arg1[%c88] : memref<136xf32, #tpu.memory_space<smem>>
    %c89 = arith.constant 89 : index
    %89 = memref.load %arg1[%c89] : memref<136xf32, #tpu.memory_space<smem>>
    %c90 = arith.constant 90 : index
    %90 = memref.load %arg1[%c90] : memref<136xf32, #tpu.memory_space<smem>>
    %c91 = arith.constant 91 : index
    %91 = memref.load %arg1[%c91] : memref<136xf32, #tpu.memory_space<smem>>
    %c92 = arith.constant 92 : index
    %92 = memref.load %arg1[%c92] : memref<136xf32, #tpu.memory_space<smem>>
    %c93 = arith.constant 93 : index
    %93 = memref.load %arg1[%c93] : memref<136xf32, #tpu.memory_space<smem>>
    %c94 = arith.constant 94 : index
    %94 = memref.load %arg1[%c94] : memref<136xf32, #tpu.memory_space<smem>>
    %c95 = arith.constant 95 : index
    %95 = memref.load %arg1[%c95] : memref<136xf32, #tpu.memory_space<smem>>
    %c96 = arith.constant 96 : index
    %96 = memref.load %arg1[%c96] : memref<136xf32, #tpu.memory_space<smem>>
    %c97 = arith.constant 97 : index
    %97 = memref.load %arg1[%c97] : memref<136xf32, #tpu.memory_space<smem>>
    %c98 = arith.constant 98 : index
    %98 = memref.load %arg1[%c98] : memref<136xf32, #tpu.memory_space<smem>>
    %c99 = arith.constant 99 : index
    %99 = memref.load %arg1[%c99] : memref<136xf32, #tpu.memory_space<smem>>
    %c100 = arith.constant 100 : index
    %100 = memref.load %arg1[%c100] : memref<136xf32, #tpu.memory_space<smem>>
    %c101 = arith.constant 101 : index
    %101 = memref.load %arg1[%c101] : memref<136xf32, #tpu.memory_space<smem>>
    %c102 = arith.constant 102 : index
    %102 = memref.load %arg1[%c102] : memref<136xf32, #tpu.memory_space<smem>>
    %c103 = arith.constant 103 : index
    %103 = memref.load %arg1[%c103] : memref<136xf32, #tpu.memory_space<smem>>
    %c104 = arith.constant 104 : index
    %104 = memref.load %arg1[%c104] : memref<136xf32, #tpu.memory_space<smem>>
    %c105 = arith.constant 105 : index
    %105 = memref.load %arg1[%c105] : memref<136xf32, #tpu.memory_space<smem>>
    %c106 = arith.constant 106 : index
    %106 = memref.load %arg1[%c106] : memref<136xf32, #tpu.memory_space<smem>>
    %c107 = arith.constant 107 : index
    %107 = memref.load %arg1[%c107] : memref<136xf32, #tpu.memory_space<smem>>
    %c108 = arith.constant 108 : index
    %108 = memref.load %arg1[%c108] : memref<136xf32, #tpu.memory_space<smem>>
    %c109 = arith.constant 109 : index
    %109 = memref.load %arg1[%c109] : memref<136xf32, #tpu.memory_space<smem>>
    %c110 = arith.constant 110 : index
    %110 = memref.load %arg1[%c110] : memref<136xf32, #tpu.memory_space<smem>>
    %c111 = arith.constant 111 : index
    %111 = memref.load %arg1[%c111] : memref<136xf32, #tpu.memory_space<smem>>
    %c112 = arith.constant 112 : index
    %112 = memref.load %arg1[%c112] : memref<136xf32, #tpu.memory_space<smem>>
    %c113 = arith.constant 113 : index
    %113 = memref.load %arg1[%c113] : memref<136xf32, #tpu.memory_space<smem>>
    %c114 = arith.constant 114 : index
    %114 = memref.load %arg1[%c114] : memref<136xf32, #tpu.memory_space<smem>>
    %c115 = arith.constant 115 : index
    %115 = memref.load %arg1[%c115] : memref<136xf32, #tpu.memory_space<smem>>
    %c116 = arith.constant 116 : index
    %116 = memref.load %arg1[%c116] : memref<136xf32, #tpu.memory_space<smem>>
    %c117 = arith.constant 117 : index
    %117 = memref.load %arg1[%c117] : memref<136xf32, #tpu.memory_space<smem>>
    %c118 = arith.constant 118 : index
    %118 = memref.load %arg1[%c118] : memref<136xf32, #tpu.memory_space<smem>>
    %c119 = arith.constant 119 : index
    %119 = memref.load %arg1[%c119] : memref<136xf32, #tpu.memory_space<smem>>
    %c120 = arith.constant 120 : index
    %120 = memref.load %arg1[%c120] : memref<136xf32, #tpu.memory_space<smem>>
    %c121 = arith.constant 121 : index
    %121 = memref.load %arg1[%c121] : memref<136xf32, #tpu.memory_space<smem>>
    %c122 = arith.constant 122 : index
    %122 = memref.load %arg1[%c122] : memref<136xf32, #tpu.memory_space<smem>>
    %c123 = arith.constant 123 : index
    %123 = memref.load %arg1[%c123] : memref<136xf32, #tpu.memory_space<smem>>
    %c124 = arith.constant 124 : index
    %124 = memref.load %arg1[%c124] : memref<136xf32, #tpu.memory_space<smem>>
    %c125 = arith.constant 125 : index
    %125 = memref.load %arg1[%c125] : memref<136xf32, #tpu.memory_space<smem>>
    %c126 = arith.constant 126 : index
    %126 = memref.load %arg1[%c126] : memref<136xf32, #tpu.memory_space<smem>>
    %c127 = arith.constant 127 : index
    %127 = memref.load %arg1[%c127] : memref<136xf32, #tpu.memory_space<smem>>
    %c128 = arith.constant 128 : index
    %128 = memref.load %arg1[%c128] : memref<136xf32, #tpu.memory_space<smem>>
    %c129 = arith.constant 129 : index
    %129 = memref.load %arg1[%c129] : memref<136xf32, #tpu.memory_space<smem>>
    %c130 = arith.constant 130 : index
    %130 = memref.load %arg1[%c130] : memref<136xf32, #tpu.memory_space<smem>>
    %c131 = arith.constant 131 : index
    %131 = memref.load %arg1[%c131] : memref<136xf32, #tpu.memory_space<smem>>
    %c132 = arith.constant 132 : index
    %132 = memref.load %arg1[%c132] : memref<136xf32, #tpu.memory_space<smem>>
    %c133 = arith.constant 133 : index
    %133 = memref.load %arg1[%c133] : memref<136xf32, #tpu.memory_space<smem>>
    %c134 = arith.constant 134 : index
    %134 = memref.load %arg1[%c134] : memref<136xf32, #tpu.memory_space<smem>>
    %c135 = arith.constant 135 : index
    %135 = memref.load %arg1[%c135] : memref<136xf32, #tpu.memory_space<smem>>
    %c0_0 = arith.constant 0 : index
    %c0_1 = arith.constant 0 : index
    %136 = vector.load %arg2[%c0_0, %c0_1] : memref<8x128xf32, #tpu.memory_space<vmem>>, vector<8x128xf32>
    %137 = vector.broadcast %0 : f32 to vector<8x128xf32>
    %138 = arith.mulf %136, %137 : vector<8x128xf32>
    %139 = vector.broadcast %5 : f32 to vector<8x128xf32>
    %140 = arith.addf %138, %139 : vector<8x128xf32>
    %141 = math.tanh %140 : vector<8x128xf32>
    %142 = vector.broadcast %1 : f32 to vector<8x128xf32>
    %143 = arith.mulf %136, %142 : vector<8x128xf32>
    %144 = vector.broadcast %6 : f32 to vector<8x128xf32>
    %145 = arith.addf %143, %144 : vector<8x128xf32>
    %146 = math.tanh %145 : vector<8x128xf32>
    %147 = vector.broadcast %2 : f32 to vector<8x128xf32>
    %148 = arith.mulf %136, %147 : vector<8x128xf32>
    %149 = vector.broadcast %7 : f32 to vector<8x128xf32>
    %150 = arith.addf %148, %149 : vector<8x128xf32>
    %151 = math.tanh %150 : vector<8x128xf32>
    %152 = vector.broadcast %3 : f32 to vector<8x128xf32>
    %153 = arith.mulf %136, %152 : vector<8x128xf32>
    %154 = vector.broadcast %8 : f32 to vector<8x128xf32>
    %155 = arith.addf %153, %154 : vector<8x128xf32>
    %156 = math.tanh %155 : vector<8x128xf32>
    %157 = vector.broadcast %4 : f32 to vector<8x128xf32>
    %158 = arith.mulf %136, %157 : vector<8x128xf32>
    %159 = vector.broadcast %9 : f32 to vector<8x128xf32>
    %160 = arith.addf %158, %159 : vector<8x128xf32>
    %161 = math.tanh %160 : vector<8x128xf32>
    %162 = vector.broadcast %10 : f32 to vector<8x128xf32>
    %163 = arith.mulf %141, %162 : vector<8x128xf32>
    %164 = vector.broadcast %15 : f32 to vector<8x128xf32>
    %165 = arith.mulf %146, %164 : vector<8x128xf32>
    %166 = arith.addf %163, %165 : vector<8x128xf32>
    %167 = vector.broadcast %20 : f32 to vector<8x128xf32>
    %168 = arith.mulf %151, %167 : vector<8x128xf32>
    %169 = arith.addf %166, %168 : vector<8x128xf32>
    %170 = vector.broadcast %25 : f32 to vector<8x128xf32>
    %171 = arith.mulf %156, %170 : vector<8x128xf32>
    %172 = arith.addf %169, %171 : vector<8x128xf32>
    %173 = vector.broadcast %30 : f32 to vector<8x128xf32>
    %174 = arith.mulf %161, %173 : vector<8x128xf32>
    %175 = arith.addf %172, %174 : vector<8x128xf32>
    %176 = vector.broadcast %35 : f32 to vector<8x128xf32>
    %177 = arith.addf %175, %176 : vector<8x128xf32>
    %178 = math.tanh %177 : vector<8x128xf32>
    %179 = vector.broadcast %11 : f32 to vector<8x128xf32>
    %180 = arith.mulf %141, %179 : vector<8x128xf32>
    %181 = vector.broadcast %16 : f32 to vector<8x128xf32>
    %182 = arith.mulf %146, %181 : vector<8x128xf32>
    %183 = arith.addf %180, %182 : vector<8x128xf32>
    %184 = vector.broadcast %21 : f32 to vector<8x128xf32>
    %185 = arith.mulf %151, %184 : vector<8x128xf32>
    %186 = arith.addf %183, %185 : vector<8x128xf32>
    %187 = vector.broadcast %26 : f32 to vector<8x128xf32>
    %188 = arith.mulf %156, %187 : vector<8x128xf32>
    %189 = arith.addf %186, %188 : vector<8x128xf32>
    %190 = vector.broadcast %31 : f32 to vector<8x128xf32>
    %191 = arith.mulf %161, %190 : vector<8x128xf32>
    %192 = arith.addf %189, %191 : vector<8x128xf32>
    %193 = vector.broadcast %36 : f32 to vector<8x128xf32>
    %194 = arith.addf %192, %193 : vector<8x128xf32>
    %195 = math.tanh %194 : vector<8x128xf32>
    %196 = vector.broadcast %12 : f32 to vector<8x128xf32>
    %197 = arith.mulf %141, %196 : vector<8x128xf32>
    %198 = vector.broadcast %17 : f32 to vector<8x128xf32>
    %199 = arith.mulf %146, %198 : vector<8x128xf32>
    %200 = arith.addf %197, %199 : vector<8x128xf32>
    %201 = vector.broadcast %22 : f32 to vector<8x128xf32>
    %202 = arith.mulf %151, %201 : vector<8x128xf32>
    %203 = arith.addf %200, %202 : vector<8x128xf32>
    %204 = vector.broadcast %27 : f32 to vector<8x128xf32>
    %205 = arith.mulf %156, %204 : vector<8x128xf32>
    %206 = arith.addf %203, %205 : vector<8x128xf32>
    %207 = vector.broadcast %32 : f32 to vector<8x128xf32>
    %208 = arith.mulf %161, %207 : vector<8x128xf32>
    %209 = arith.addf %206, %208 : vector<8x128xf32>
    %210 = vector.broadcast %37 : f32 to vector<8x128xf32>
    %211 = arith.addf %209, %210 : vector<8x128xf32>
    %212 = math.tanh %211 : vector<8x128xf32>
    %213 = vector.broadcast %13 : f32 to vector<8x128xf32>
    %214 = arith.mulf %141, %213 : vector<8x128xf32>
    %215 = vector.broadcast %18 : f32 to vector<8x128xf32>
    %216 = arith.mulf %146, %215 : vector<8x128xf32>
    %217 = arith.addf %214, %216 : vector<8x128xf32>
    %218 = vector.broadcast %23 : f32 to vector<8x128xf32>
    %219 = arith.mulf %151, %218 : vector<8x128xf32>
    %220 = arith.addf %217, %219 : vector<8x128xf32>
    %221 = vector.broadcast %28 : f32 to vector<8x128xf32>
    %222 = arith.mulf %156, %221 : vector<8x128xf32>
    %223 = arith.addf %220, %222 : vector<8x128xf32>
    %224 = vector.broadcast %33 : f32 to vector<8x128xf32>
    %225 = arith.mulf %161, %224 : vector<8x128xf32>
    %226 = arith.addf %223, %225 : vector<8x128xf32>
    %227 = vector.broadcast %38 : f32 to vector<8x128xf32>
    %228 = arith.addf %226, %227 : vector<8x128xf32>
    %229 = math.tanh %228 : vector<8x128xf32>
    %230 = vector.broadcast %14 : f32 to vector<8x128xf32>
    %231 = arith.mulf %141, %230 : vector<8x128xf32>
    %232 = vector.broadcast %19 : f32 to vector<8x128xf32>
    %233 = arith.mulf %146, %232 : vector<8x128xf32>
    %234 = arith.addf %231, %233 : vector<8x128xf32>
    %235 = vector.broadcast %24 : f32 to vector<8x128xf32>
    %236 = arith.mulf %151, %235 : vector<8x128xf32>
    %237 = arith.addf %234, %236 : vector<8x128xf32>
    %238 = vector.broadcast %29 : f32 to vector<8x128xf32>
    %239 = arith.mulf %156, %238 : vector<8x128xf32>
    %240 = arith.addf %237, %239 : vector<8x128xf32>
    %241 = vector.broadcast %34 : f32 to vector<8x128xf32>
    %242 = arith.mulf %161, %241 : vector<8x128xf32>
    %243 = arith.addf %240, %242 : vector<8x128xf32>
    %244 = vector.broadcast %39 : f32 to vector<8x128xf32>
    %245 = arith.addf %243, %244 : vector<8x128xf32>
    %246 = math.tanh %245 : vector<8x128xf32>
    %247 = vector.broadcast %40 : f32 to vector<8x128xf32>
    %248 = arith.mulf %178, %247 : vector<8x128xf32>
    %249 = vector.broadcast %45 : f32 to vector<8x128xf32>
    %250 = arith.mulf %195, %249 : vector<8x128xf32>
    %251 = arith.addf %248, %250 : vector<8x128xf32>
    %252 = vector.broadcast %50 : f32 to vector<8x128xf32>
    %253 = arith.mulf %212, %252 : vector<8x128xf32>
    %254 = arith.addf %251, %253 : vector<8x128xf32>
    %255 = vector.broadcast %55 : f32 to vector<8x128xf32>
    %256 = arith.mulf %229, %255 : vector<8x128xf32>
    %257 = arith.addf %254, %256 : vector<8x128xf32>
    %258 = vector.broadcast %60 : f32 to vector<8x128xf32>
    %259 = arith.mulf %246, %258 : vector<8x128xf32>
    %260 = arith.addf %257, %259 : vector<8x128xf32>
    %261 = vector.broadcast %65 : f32 to vector<8x128xf32>
    %262 = arith.addf %260, %261 : vector<8x128xf32>
    %263 = math.tanh %262 : vector<8x128xf32>
    %264 = vector.broadcast %41 : f32 to vector<8x128xf32>
    %265 = arith.mulf %178, %264 : vector<8x128xf32>
    %266 = vector.broadcast %46 : f32 to vector<8x128xf32>
    %267 = arith.mulf %195, %266 : vector<8x128xf32>
    %268 = arith.addf %265, %267 : vector<8x128xf32>
    %269 = vector.broadcast %51 : f32 to vector<8x128xf32>
    %270 = arith.mulf %212, %269 : vector<8x128xf32>
    %271 = arith.addf %268, %270 : vector<8x128xf32>
    %272 = vector.broadcast %56 : f32 to vector<8x128xf32>
    %273 = arith.mulf %229, %272 : vector<8x128xf32>
    %274 = arith.addf %271, %273 : vector<8x128xf32>
    %275 = vector.broadcast %61 : f32 to vector<8x128xf32>
    %276 = arith.mulf %246, %275 : vector<8x128xf32>
    %277 = arith.addf %274, %276 : vector<8x128xf32>
    %278 = vector.broadcast %66 : f32 to vector<8x128xf32>
    %279 = arith.addf %277, %278 : vector<8x128xf32>
    %280 = math.tanh %279 : vector<8x128xf32>
    %281 = vector.broadcast %42 : f32 to vector<8x128xf32>
    %282 = arith.mulf %178, %281 : vector<8x128xf32>
    %283 = vector.broadcast %47 : f32 to vector<8x128xf32>
    %284 = arith.mulf %195, %283 : vector<8x128xf32>
    %285 = arith.addf %282, %284 : vector<8x128xf32>
    %286 = vector.broadcast %52 : f32 to vector<8x128xf32>
    %287 = arith.mulf %212, %286 : vector<8x128xf32>
    %288 = arith.addf %285, %287 : vector<8x128xf32>
    %289 = vector.broadcast %57 : f32 to vector<8x128xf32>
    %290 = arith.mulf %229, %289 : vector<8x128xf32>
    %291 = arith.addf %288, %290 : vector<8x128xf32>
    %292 = vector.broadcast %62 : f32 to vector<8x128xf32>
    %293 = arith.mulf %246, %292 : vector<8x128xf32>
    %294 = arith.addf %291, %293 : vector<8x128xf32>
    %295 = vector.broadcast %67 : f32 to vector<8x128xf32>
    %296 = arith.addf %294, %295 : vector<8x128xf32>
    %297 = math.tanh %296 : vector<8x128xf32>
    %298 = vector.broadcast %43 : f32 to vector<8x128xf32>
    %299 = arith.mulf %178, %298 : vector<8x128xf32>
    %300 = vector.broadcast %48 : f32 to vector<8x128xf32>
    %301 = arith.mulf %195, %300 : vector<8x128xf32>
    %302 = arith.addf %299, %301 : vector<8x128xf32>
    %303 = vector.broadcast %53 : f32 to vector<8x128xf32>
    %304 = arith.mulf %212, %303 : vector<8x128xf32>
    %305 = arith.addf %302, %304 : vector<8x128xf32>
    %306 = vector.broadcast %58 : f32 to vector<8x128xf32>
    %307 = arith.mulf %229, %306 : vector<8x128xf32>
    %308 = arith.addf %305, %307 : vector<8x128xf32>
    %309 = vector.broadcast %63 : f32 to vector<8x128xf32>
    %310 = arith.mulf %246, %309 : vector<8x128xf32>
    %311 = arith.addf %308, %310 : vector<8x128xf32>
    %312 = vector.broadcast %68 : f32 to vector<8x128xf32>
    %313 = arith.addf %311, %312 : vector<8x128xf32>
    %314 = math.tanh %313 : vector<8x128xf32>
    %315 = vector.broadcast %44 : f32 to vector<8x128xf32>
    %316 = arith.mulf %178, %315 : vector<8x128xf32>
    %317 = vector.broadcast %49 : f32 to vector<8x128xf32>
    %318 = arith.mulf %195, %317 : vector<8x128xf32>
    %319 = arith.addf %316, %318 : vector<8x128xf32>
    %320 = vector.broadcast %54 : f32 to vector<8x128xf32>
    %321 = arith.mulf %212, %320 : vector<8x128xf32>
    %322 = arith.addf %319, %321 : vector<8x128xf32>
    %323 = vector.broadcast %59 : f32 to vector<8x128xf32>
    %324 = arith.mulf %229, %323 : vector<8x128xf32>
    %325 = arith.addf %322, %324 : vector<8x128xf32>
    %326 = vector.broadcast %64 : f32 to vector<8x128xf32>
    %327 = arith.mulf %246, %326 : vector<8x128xf32>
    %328 = arith.addf %325, %327 : vector<8x128xf32>
    %329 = vector.broadcast %69 : f32 to vector<8x128xf32>
    %330 = arith.addf %328, %329 : vector<8x128xf32>
    %331 = math.tanh %330 : vector<8x128xf32>
    %332 = vector.broadcast %70 : f32 to vector<8x128xf32>
    %333 = arith.mulf %263, %332 : vector<8x128xf32>
    %334 = vector.broadcast %75 : f32 to vector<8x128xf32>
    %335 = arith.mulf %280, %334 : vector<8x128xf32>
    %336 = arith.addf %333, %335 : vector<8x128xf32>
    %337 = vector.broadcast %80 : f32 to vector<8x128xf32>
    %338 = arith.mulf %297, %337 : vector<8x128xf32>
    %339 = arith.addf %336, %338 : vector<8x128xf32>
    %340 = vector.broadcast %85 : f32 to vector<8x128xf32>
    %341 = arith.mulf %314, %340 : vector<8x128xf32>
    %342 = arith.addf %339, %341 : vector<8x128xf32>
    %343 = vector.broadcast %90 : f32 to vector<8x128xf32>
    %344 = arith.mulf %331, %343 : vector<8x128xf32>
    %345 = arith.addf %342, %344 : vector<8x128xf32>
    %346 = vector.broadcast %95 : f32 to vector<8x128xf32>
    %347 = arith.addf %345, %346 : vector<8x128xf32>
    %348 = math.tanh %347 : vector<8x128xf32>
    %349 = vector.broadcast %71 : f32 to vector<8x128xf32>
    %350 = arith.mulf %263, %349 : vector<8x128xf32>
    %351 = vector.broadcast %76 : f32 to vector<8x128xf32>
    %352 = arith.mulf %280, %351 : vector<8x128xf32>
    %353 = arith.addf %350, %352 : vector<8x128xf32>
    %354 = vector.broadcast %81 : f32 to vector<8x128xf32>
    %355 = arith.mulf %297, %354 : vector<8x128xf32>
    %356 = arith.addf %353, %355 : vector<8x128xf32>
    %357 = vector.broadcast %86 : f32 to vector<8x128xf32>
    %358 = arith.mulf %314, %357 : vector<8x128xf32>
    %359 = arith.addf %356, %358 : vector<8x128xf32>
    %360 = vector.broadcast %91 : f32 to vector<8x128xf32>
    %361 = arith.mulf %331, %360 : vector<8x128xf32>
    %362 = arith.addf %359, %361 : vector<8x128xf32>
    %363 = vector.broadcast %96 : f32 to vector<8x128xf32>
    %364 = arith.addf %362, %363 : vector<8x128xf32>
    %365 = math.tanh %364 : vector<8x128xf32>
    %366 = vector.broadcast %72 : f32 to vector<8x128xf32>
    %367 = arith.mulf %263, %366 : vector<8x128xf32>
    %368 = vector.broadcast %77 : f32 to vector<8x128xf32>
    %369 = arith.mulf %280, %368 : vector<8x128xf32>
    %370 = arith.addf %367, %369 : vector<8x128xf32>
    %371 = vector.broadcast %82 : f32 to vector<8x128xf32>
    %372 = arith.mulf %297, %371 : vector<8x128xf32>
    %373 = arith.addf %370, %372 : vector<8x128xf32>
    %374 = vector.broadcast %87 : f32 to vector<8x128xf32>
    %375 = arith.mulf %314, %374 : vector<8x128xf32>
    %376 = arith.addf %373, %375 : vector<8x128xf32>
    %377 = vector.broadcast %92 : f32 to vector<8x128xf32>
    %378 = arith.mulf %331, %377 : vector<8x128xf32>
    %379 = arith.addf %376, %378 : vector<8x128xf32>
    %380 = vector.broadcast %97 : f32 to vector<8x128xf32>
    %381 = arith.addf %379, %380 : vector<8x128xf32>
    %382 = math.tanh %381 : vector<8x128xf32>
    %383 = vector.broadcast %73 : f32 to vector<8x128xf32>
    %384 = arith.mulf %263, %383 : vector<8x128xf32>
    %385 = vector.broadcast %78 : f32 to vector<8x128xf32>
    %386 = arith.mulf %280, %385 : vector<8x128xf32>
    %387 = arith.addf %384, %386 : vector<8x128xf32>
    %388 = vector.broadcast %83 : f32 to vector<8x128xf32>
    %389 = arith.mulf %297, %388 : vector<8x128xf32>
    %390 = arith.addf %387, %389 : vector<8x128xf32>
    %391 = vector.broadcast %88 : f32 to vector<8x128xf32>
    %392 = arith.mulf %314, %391 : vector<8x128xf32>
    %393 = arith.addf %390, %392 : vector<8x128xf32>
    %394 = vector.broadcast %93 : f32 to vector<8x128xf32>
    %395 = arith.mulf %331, %394 : vector<8x128xf32>
    %396 = arith.addf %393, %395 : vector<8x128xf32>
    %397 = vector.broadcast %98 : f32 to vector<8x128xf32>
    %398 = arith.addf %396, %397 : vector<8x128xf32>
    %399 = math.tanh %398 : vector<8x128xf32>
    %400 = vector.broadcast %74 : f32 to vector<8x128xf32>
    %401 = arith.mulf %263, %400 : vector<8x128xf32>
    %402 = vector.broadcast %79 : f32 to vector<8x128xf32>
    %403 = arith.mulf %280, %402 : vector<8x128xf32>
    %404 = arith.addf %401, %403 : vector<8x128xf32>
    %405 = vector.broadcast %84 : f32 to vector<8x128xf32>
    %406 = arith.mulf %297, %405 : vector<8x128xf32>
    %407 = arith.addf %404, %406 : vector<8x128xf32>
    %408 = vector.broadcast %89 : f32 to vector<8x128xf32>
    %409 = arith.mulf %314, %408 : vector<8x128xf32>
    %410 = arith.addf %407, %409 : vector<8x128xf32>
    %411 = vector.broadcast %94 : f32 to vector<8x128xf32>
    %412 = arith.mulf %331, %411 : vector<8x128xf32>
    %413 = arith.addf %410, %412 : vector<8x128xf32>
    %414 = vector.broadcast %99 : f32 to vector<8x128xf32>
    %415 = arith.addf %413, %414 : vector<8x128xf32>
    %416 = math.tanh %415 : vector<8x128xf32>
    %417 = vector.broadcast %100 : f32 to vector<8x128xf32>
    %418 = arith.mulf %348, %417 : vector<8x128xf32>
    %419 = vector.broadcast %105 : f32 to vector<8x128xf32>
    %420 = arith.mulf %365, %419 : vector<8x128xf32>
    %421 = arith.addf %418, %420 : vector<8x128xf32>
    %422 = vector.broadcast %110 : f32 to vector<8x128xf32>
    %423 = arith.mulf %382, %422 : vector<8x128xf32>
    %424 = arith.addf %421, %423 : vector<8x128xf32>
    %425 = vector.broadcast %115 : f32 to vector<8x128xf32>
    %426 = arith.mulf %399, %425 : vector<8x128xf32>
    %427 = arith.addf %424, %426 : vector<8x128xf32>
    %428 = vector.broadcast %120 : f32 to vector<8x128xf32>
    %429 = arith.mulf %416, %428 : vector<8x128xf32>
    %430 = arith.addf %427, %429 : vector<8x128xf32>
    %431 = vector.broadcast %125 : f32 to vector<8x128xf32>
    %432 = arith.addf %430, %431 : vector<8x128xf32>
    %433 = math.tanh %432 : vector<8x128xf32>
    %434 = vector.broadcast %101 : f32 to vector<8x128xf32>
    %435 = arith.mulf %348, %434 : vector<8x128xf32>
    %436 = vector.broadcast %106 : f32 to vector<8x128xf32>
    %437 = arith.mulf %365, %436 : vector<8x128xf32>
    %438 = arith.addf %435, %437 : vector<8x128xf32>
    %439 = vector.broadcast %111 : f32 to vector<8x128xf32>
    %440 = arith.mulf %382, %439 : vector<8x128xf32>
    %441 = arith.addf %438, %440 : vector<8x128xf32>
    %442 = vector.broadcast %116 : f32 to vector<8x128xf32>
    %443 = arith.mulf %399, %442 : vector<8x128xf32>
    %444 = arith.addf %441, %443 : vector<8x128xf32>
    %445 = vector.broadcast %121 : f32 to vector<8x128xf32>
    %446 = arith.mulf %416, %445 : vector<8x128xf32>
    %447 = arith.addf %444, %446 : vector<8x128xf32>
    %448 = vector.broadcast %126 : f32 to vector<8x128xf32>
    %449 = arith.addf %447, %448 : vector<8x128xf32>
    %450 = math.tanh %449 : vector<8x128xf32>
    %451 = vector.broadcast %102 : f32 to vector<8x128xf32>
    %452 = arith.mulf %348, %451 : vector<8x128xf32>
    %453 = vector.broadcast %107 : f32 to vector<8x128xf32>
    %454 = arith.mulf %365, %453 : vector<8x128xf32>
    %455 = arith.addf %452, %454 : vector<8x128xf32>
    %456 = vector.broadcast %112 : f32 to vector<8x128xf32>
    %457 = arith.mulf %382, %456 : vector<8x128xf32>
    %458 = arith.addf %455, %457 : vector<8x128xf32>
    %459 = vector.broadcast %117 : f32 to vector<8x128xf32>
    %460 = arith.mulf %399, %459 : vector<8x128xf32>
    %461 = arith.addf %458, %460 : vector<8x128xf32>
    %462 = vector.broadcast %122 : f32 to vector<8x128xf32>
    %463 = arith.mulf %416, %462 : vector<8x128xf32>
    %464 = arith.addf %461, %463 : vector<8x128xf32>
    %465 = vector.broadcast %127 : f32 to vector<8x128xf32>
    %466 = arith.addf %464, %465 : vector<8x128xf32>
    %467 = math.tanh %466 : vector<8x128xf32>
    %468 = vector.broadcast %103 : f32 to vector<8x128xf32>
    %469 = arith.mulf %348, %468 : vector<8x128xf32>
    %470 = vector.broadcast %108 : f32 to vector<8x128xf32>
    %471 = arith.mulf %365, %470 : vector<8x128xf32>
    %472 = arith.addf %469, %471 : vector<8x128xf32>
    %473 = vector.broadcast %113 : f32 to vector<8x128xf32>
    %474 = arith.mulf %382, %473 : vector<8x128xf32>
    %475 = arith.addf %472, %474 : vector<8x128xf32>
    %476 = vector.broadcast %118 : f32 to vector<8x128xf32>
    %477 = arith.mulf %399, %476 : vector<8x128xf32>
    %478 = arith.addf %475, %477 : vector<8x128xf32>
    %479 = vector.broadcast %123 : f32 to vector<8x128xf32>
    %480 = arith.mulf %416, %479 : vector<8x128xf32>
    %481 = arith.addf %478, %480 : vector<8x128xf32>
    %482 = vector.broadcast %128 : f32 to vector<8x128xf32>
    %483 = arith.addf %481, %482 : vector<8x128xf32>
    %484 = math.tanh %483 : vector<8x128xf32>
    %485 = vector.broadcast %104 : f32 to vector<8x128xf32>
    %486 = arith.mulf %348, %485 : vector<8x128xf32>
    %487 = vector.broadcast %109 : f32 to vector<8x128xf32>
    %488 = arith.mulf %365, %487 : vector<8x128xf32>
    %489 = arith.addf %486, %488 : vector<8x128xf32>
    %490 = vector.broadcast %114 : f32 to vector<8x128xf32>
    %491 = arith.mulf %382, %490 : vector<8x128xf32>
    %492 = arith.addf %489, %491 : vector<8x128xf32>
    %493 = vector.broadcast %119 : f32 to vector<8x128xf32>
    %494 = arith.mulf %399, %493 : vector<8x128xf32>
    %495 = arith.addf %492, %494 : vector<8x128xf32>
    %496 = vector.broadcast %124 : f32 to vector<8x128xf32>
    %497 = arith.mulf %416, %496 : vector<8x128xf32>
    %498 = arith.addf %495, %497 : vector<8x128xf32>
    %499 = vector.broadcast %129 : f32 to vector<8x128xf32>
    %500 = arith.addf %498, %499 : vector<8x128xf32>
    %501 = math.tanh %500 : vector<8x128xf32>
    %502 = vector.broadcast %130 : f32 to vector<8x128xf32>
    %503 = arith.mulf %433, %502 : vector<8x128xf32>
    %504 = vector.broadcast %131 : f32 to vector<8x128xf32>
    %505 = arith.mulf %450, %504 : vector<8x128xf32>
    %506 = arith.addf %503, %505 : vector<8x128xf32>
    %507 = vector.broadcast %132 : f32 to vector<8x128xf32>
    %508 = arith.mulf %467, %507 : vector<8x128xf32>
    %509 = arith.addf %506, %508 : vector<8x128xf32>
    %510 = vector.broadcast %133 : f32 to vector<8x128xf32>
    %511 = arith.mulf %484, %510 : vector<8x128xf32>
    %512 = arith.addf %509, %511 : vector<8x128xf32>
    %513 = vector.broadcast %134 : f32 to vector<8x128xf32>
    %514 = arith.mulf %501, %513 : vector<8x128xf32>
    %515 = arith.addf %512, %514 : vector<8x128xf32>
    %516 = vector.broadcast %135 : f32 to vector<8x128xf32>
    %517 = arith.addf %515, %516 : vector<8x128xf32>
    %c0_2 = arith.constant 0 : index
    %c0_3 = arith.constant 0 : index
    %518 = vector.load %arg3[%c0_2, %c0_3] : memref<8x128xf32, #tpu.memory_space<vmem>>, vector<8x128xf32>
    tpu.vector_store %arg3[%c0_2, %c0_3], %517 {strides = array<i32>} : memref<8x128xf32, #tpu.memory_space<vmem>>, vector<8x128xf32>,
    return
  }
  func.func @transform_0(%arg0: i32) -> i32 {
    %c0_i32 = arith.constant 0 : i32
    %c0_i32_0 = arith.constant 0 : i32
    return %c0_i32 : i32
  }
  func.func @transform_1(%arg0: i32) -> (i32, i32) {
    %c0_i32 = arith.constant 0 : i32
    %c0_i32_0 = arith.constant 0 : i32
    return %arg0, %c0_i32 : i32, i32
  }
  func.func @transform_2(%arg0: i32) -> (i32, i32) {
    %c0_i32 = arith.constant 0 : i32
    %c0_i32_0 = arith.constant 0 : i32
    return %arg0, %c0_i32 : i32, i32
  }
}

</mosaic_0001>

<llo_original>
// kernel: tpu_custom_call.1
$region0: #{tpu_custom_call.1}
  #allocation0 [shape = 'u32[]', space=smem, size = 0x4, offset = 0x4, fixed_abs, tag = 'smem constant byte address 0x4 - core index']
  #allocation1 [shape = 'u32[144,128]{1,0:T(1,128)}', space=vmem, size = 0x12000, scoped, tag = 'internal scratch']
  %s0 = inlined_call_operand.hbm [shape: f32[136], index: 0, kind: input, shape index: {}]
  %s1 = inlined_call_operand.hbm [shape: f32[8,128], index: 1, kind: input, shape index: {}]
  %s2 = inlined_call_operand.hbm [shape: f32[8,128], index: 2, kind: output, shape index: {}]
  %s3 = sld [smem:[#allocation0]]
  $region26: #{tpu_custom_call.1} parent=0
    _
  %s5 = ssub.s32 1, %s3
  %s6 = scalar_select 0, %s5, %s3
  $region1: #{tpu_custom_call.1} parent=0
    #allocation2 [shape = 'u8[1024]{0}', space=smem, size = 0x400, scoped, tag = 'input window, operand 0, single buffered']
    #allocation3 [shape = 's32[1]{0}', space=sflag, size = 0x4, scoped, tag = 'scoped memory for tpu_custom_call.1']
    #allocation4 [shape = 's32[1]{0}', space=sflag, size = 0x4, scoped, tag = 'scoped memory for tpu_custom_call.1']
    #allocation5 [shape = 's32[1]{0}', space=sflag, size = 0x4, scoped, tag = 'scoped memory for tpu_custom_call.1']
    #allocation6 [shape = 'u8[4096]{0}', space=vmem, size = 0x1000, scoped, tag = 'input window, operand 1, single buffered']
    #allocation7 [shape = 'u8[4096]{0}', space=vmem, size = 0x1000, scoped, tag = 'output window, operand 0, single buffered']
    %7 = vsyncpa [#allocation5], 0
    %8 = vsyncpa [#allocation3], 0
    %9 = vsyncpa [#allocation4], 0
    // Predicated region
    $region2: #{tpu_custom_call.1} parent=1 // pred_check
      _
    $region3: #{tpu_custom_call.1} parent=1 // pred_check_branch
      %11 = sbr.rel (0) target = $region5
    $region4: #{tpu_custom_call.1} parent=1 // pred_region
      %s13 = ssub.s32 32, 32
      %14 = vsyncadd [#allocation5], %s13
      %17 = dma.hbm_to_smem %s0, 32, [#allocation2], [#allocation5]
    $region5: #{tpu_custom_call.1} parent=1 // pred_fallthru
      _
    // Predicated region
    $region6: #{tpu_custom_call.1} parent=1 // pred_check
      _
    $region7: #{tpu_custom_call.1} parent=1 // pred_check_branch
      %19 = sbr.rel (0) target = $region9
    $region8: #{tpu_custom_call.1} parent=1 // pred_region
      %s21 = ssub.s32 128, 128
      %22 = vsyncadd [#allocation3], %s21
      %s24 = sshll.u32 [#allocation6], 4
      %s25 = int_to_ptr.vmem [resolvable:$true] %s24
      %27 = dma.hbm_to_vmem [thread:$0]  %s1, 128, %s25, [#allocation3]
    $region9: #{tpu_custom_call.1} parent=1 // pred_fallthru
      _
    // Predicated region
    $region10: #{tpu_custom_call.1} parent=1 // pred_check
      _
    $region11: #{tpu_custom_call.1} parent=1 // pred_check_branch
      %29 = sbr.rel (0) target = $region13
    $region12: #{tpu_custom_call.1} parent=1 // pred_region
      %30 = dma.done [#allocation5], 32
    $region13: #{tpu_custom_call.1} parent=1 // pred_fallthru
      _
    // Predicated region
    $region14: #{tpu_custom_call.1} parent=1 // pred_check
      _
    $region15: #{tpu_custom_call.1} parent=1 // pred_check_branch
      %32 = sbr.rel (0) target = $region17
    $region16: #{tpu_custom_call.1} parent=1 // pred_region
      %33 = dma.done [#allocation3], 128
    $region17: #{tpu_custom_call.1} parent=1 // pred_fallthru
      _
    %34 = sfence
    %s35 = sld [smem:[#allocation2]]
    %s36 = sld [smem:[#allocation2 + $0x1]]
    %s37 = sld [smem:[#allocation2 + $0x2]]
    %s38 = sld [smem:[#allocation2 + $0x3]]
    %s39 = sld [smem:[#allocation2 + $0x4]]
    %s40 = sld [smem:[#allocation2 + $0x5]]
    %s41 = sld [smem:[#allocation2 + $0x6]]
    %s42 = sld [smem:[#allocation2 + $0x7]]
    %s43 = sld [smem:[#allocation2 + $0x8]]
    %s44 = sld [smem:[#allocation2 + $0x9]]
    %s45 = sld [smem:[#allocation2 + $0xa]]
    %s46 = sld [smem:[#allocation2 + $0xb]]
    %s47 = sld [smem:[#allocation2 + $0xc]]
    %s48 = sld [smem:[#allocation2 + $0xd]]
    %s49 = sld [smem:[#allocation2 + $0xe]]
    %s50 = sld [smem:[#allocation2 + $0xf]]
    %s51 = sld [smem:[#allocation2 + $0x10]]
    %s52 = sld [smem:[#allocation2 + $0x11]]
    %s53 = sld [smem:[#allocation2 + $0x12]]
    %s54 = sld [smem:[#allocation2 + $0x13]]
    %s55 = sld [smem:[#allocation2 + $0x14]]
    %s56 = sld [smem:[#allocation2 + $0x15]]
    %s57 = sld [smem:[#allocation2 + $0x16]]
    %s58 = sld [smem:[#allocation2 + $0x17]]
    %s59 = sld [smem:[#allocation2 + $0x18]]
    %s60 = sld [smem:[#allocation2 + $0x19]]
    %s61 = sld [smem:[#allocation2 + $0x1a]]
    %s62 = sld [smem:[#allocation2 + $0x1b]]
    %s63 = sld [smem:[#allocation2 + $0x1c]]
    %s64 = sld [smem:[#allocation2 + $0x1d]]
    %s65 = sld [smem:[#allocation2 + $0x1e]]
    %s66 = sld [smem:[#allocation2 + $0x1f]]
    %s67 = sld [smem:[#allocation2 + $0x20]]
    %s68 = sld [smem:[#allocation2 + $0x21]]
    %s69 = sld [smem:[#allocation2 + $0x22]]
    %s70 = sld [smem:[#allocation2 + $0x23]]
    %s71 = sld [smem:[#allocation2 + $0x24]]
    %s72 = sld [smem:[#allocation2 + $0x25]]
    %s73 = sld [smem:[#allocation2 + $0x26]]
    %s74 = sld [smem:[#allocation2 + $0x27]]
    %s75 = sld [smem:[#allocation2 + $0x28]]
    %s76 = sld [smem:[#allocation2 + $0x29]]
    %s77 = sld [smem:[#allocation2 + $0x2a]]
    %s78 = sld [smem:[#allocation2 + $0x2b]]
    %s79 = sld [smem:[#allocation2 + $0x2c]]
    %s80 = sld [smem:[#allocation2 + $0x2d]]
    %s81 = sld [smem:[#allocation2 + $0x2e]]
    %s82 = sld [smem:[#allocation2 + $0x2f]]
    %s83 = sld [smem:[#allocation2 + $0x30]]
    %s84 = sld [smem:[#allocation2 + $0x31]]
    %s85 = sld [smem:[#allocation2 + $0x32]]
    %s86 = sld [smem:[#allocation2 + $0x33]]
    %s87 = sld [smem:[#allocation2 + $0x34]]
    %s88 = sld [smem:[#allocation2 + $0x35]]
    %s89 = sld [smem:[#allocation2 + $0x36]]
    %s90 = sld [smem:[#allocation2 + $0x37]]
    %s91 = sld [smem:[#allocation2 + $0x38]]
    %s92 = sld [smem:[#allocation2 + $0x39]]
    %s93 = sld [smem:[#allocation2 + $0x3a]]
    %s94 = sld [smem:[#allocation2 + $0x3b]]
    %s95 = sld [smem:[#allocation2 + $0x3c]]
    %s96 = sld [smem:[#allocation2 + $0x3d]]
    %s97 = sld [smem:[#allocation2 + $0x3e]]
    %s98 = sld [smem:[#allocation2 + $0x3f]]
    %s99 = sld [smem:[#allocation2 + $0x40]]
    %s100 = sld [smem:[#allocation2 + $0x41]]
    %s101 = sld [smem:[#allocation2 + $0x42]]
    %s102 = sld [smem:[#allocation2 + $0x43]]
    %s103 = sld [smem:[#allocation2 + $0x44]]
    %s104 = sld [smem:[#allocation2 + $0x45]]
    %s105 = sld [smem:[#allocation2 + $0x46]]
    %s106 = sld [smem:[#allocation2 + $0x47]]
    %s107 = sld [smem:[#allocation2 + $0x48]]
    %s108 = sld [smem:[#allocation2 + $0x49]]
    %s109 = sld [smem:[#allocation2 + $0x4a]]
    %s110 = sld [smem:[#allocation2 + $0x4b]]
    %s111 = sld [smem:[#allocation2 + $0x4c]]
    %s112 = sld [smem:[#allocation2 + $0x4d]]
    %s113 = sld [smem:[#allocation2 + $0x4e]]
    %s114 = sld [smem:[#allocation2 + $0x4f]]
    %s115 = sld [smem:[#allocation2 + $0x50]]
    %s116 = sld [smem:[#allocation2 + $0x51]]
    %s117 = sld [smem:[#allocation2 + $0x52]]
    %s118 = sld [smem:[#allocation2 + $0x53]]
    %s119 = sld [smem:[#allocation2 + $0x54]]
    %s120 = sld [smem:[#allocation2 + $0x55]]
    %s121 = sld [smem:[#allocation2 + $0x56]]
    %s122 = sld [smem:[#allocation2 + $0x57]]
    %s123 = sld [smem:[#allocation2 + $0x58]]
    %s124 = sld [smem:[#allocation2 + $0x59]]
    %s125 = sld [smem:[#allocation2 + $0x5a]]
    %s126 = sld [smem:[#allocation2 + $0x5b]]
    %s127 = sld [smem:[#allocation2 + $0x5c]]
    %s128 = sld [smem:[#allocation2 + $0x5d]]
    %s129 = sld [smem:[#allocation2 + $0x5e]]
    %s130 = sld [smem:[#allocation2 + $0x5f]]
    %s131 = sld [smem:[#allocation2 + $0x60]]
    %s132 = sld [smem:[#allocation2 + $0x61]]
    %s133 = sld [smem:[#allocation2 + $0x62]]
    %s134 = sld [smem:[#allocation2 + $0x63]]
    %s135 = sld [smem:[#allocation2 + $0x64]]
    %s136 = sld [smem:[#allocation2 + $0x65]]
    %s137 = sld [smem:[#allocation2 + $0x66]]
    %s138 = sld [smem:[#allocation2 + $0x67]]
    %s139 = sld [smem:[#allocation2 + $0x68]]
    %s140 = sld [smem:[#allocation2 + $0x69]]
    %s141 = sld [smem:[#allocation2 + $0x6a]]
    %s142 = sld [smem:[#allocation2 + $0x6b]]
    %s143 = sld [smem:[#allocation2 + $0x6c]]
    %s144 = sld [smem:[#allocation2 + $0x6d]]
    %s145 = sld [smem:[#allocation2 + $0x6e]]
    %s146 = sld [smem:[#allocation2 + $0x6f]]
    %s147 = sld [smem:[#allocation2 + $0x70]]
    %s148 = sld [smem:[#allocation2 + $0x71]]
    %s149 = sld [smem:[#allocation2 + $0x72]]
    %s150 = sld [smem:[#allocation2 + $0x73]]
    %s151 = sld [smem:[#allocation2 + $0x74]]
    %s152 = sld [smem:[#allocation2 + $0x75]]
    %s153 = sld [smem:[#allocation2 + $0x76]]
    %s154 = sld [smem:[#allocation2 + $0x77]]
    %s155 = sld [smem:[#allocation2 + $0x78]]
    %s156 = sld [smem:[#allocation2 + $0x79]]
    %s157 = sld [smem:[#allocation2 + $0x7a]]
    %s158 = sld [smem:[#allocation2 + $0x7b]]
    %s159 = sld [smem:[#allocation2 + $0x7c]]
    %s160 = sld [smem:[#allocation2 + $0x7d]]
    %s161 = sld [smem:[#allocation2 + $0x7e]]
    %s162 = sld [smem:[#allocation2 + $0x7f]]
    %s163 = sld [smem:[#allocation2 + $0x80]]
    %s164 = sld [smem:[#allocation2 + $0x81]]
    %s165 = sld [smem:[#allocation2 + $0x82]]
    %s166 = sld [smem:[#allocation2 + $0x83]]
    %s167 = sld [smem:[#allocation2 + $0x84]]
    %s168 = sld [smem:[#allocation2 + $0x85]]
    %s169 = sld [smem:[#allocation2 + $0x86]]
    %s170 = sld [smem:[#allocation2 + $0x87]]
    %v171 = vld [vmem:[#allocation6] sm:$0xff]
    %v172 = vstv %s35
    %v173 = vmul.f32 %v171, %v172
    %v174 = vstv %s40
    %v175 = vadd.f32 %v173, %v174
    %v176 = vtanh.pop %v175
    %v177 = vstv %s36
    %v178 = vmul.f32 %v171, %v177
    %v179 = vstv %s41
    %v180 = vadd.f32 %v178, %v179
    %v181 = vtanh.pop %v180
    %v182 = vstv %s37
    %v183 = vmul.f32 %v171, %v182
    %v184 = vstv %s42
    %v185 = vadd.f32 %v183, %v184
    %v186 = vtanh.pop %v185
    %v187 = vstv %s38
    %v188 = vmul.f32 %v171, %v187
    %v189 = vstv %s43
    %v190 = vadd.f32 %v188, %v189
    %v191 = vtanh.pop %v190
    %v192 = vstv %s39
    %v193 = vmul.f32 %v171, %v192
    %v194 = vstv %s44
    %v195 = vadd.f32 %v193, %v194
    %v196 = vtanh.pop %v195
    %v197 = vstv %s45
    %v198 = vmul.f32 %v176, %v197
    %v199 = vstv %s50
    %v200 = vmul.f32 %v181, %v199
    %v201 = vadd.f32 %v198, %v200
    %v202 = vstv %s55
    %v203 = vmul.f32 %v186, %v202
    %v204 = vadd.f32 %v201, %v203
    %v205 = vstv %s60
    %v206 = vmul.f32 %v191, %v205
    %v207 = vadd.f32 %v204, %v206
    %v208 = vstv %s65
    %v209 = vmul.f32 %v196, %v208
    %v210 = vadd.f32 %v207, %v209
    %v211 = vstv %s70
    %v212 = vadd.f32 %v210, %v211
    %v213 = vtanh.pop %v212
    %v214 = vstv %s46
    %v215 = vmul.f32 %v176, %v214
    %v216 = vstv %s51
    %v217 = vmul.f32 %v181, %v216
    %v218 = vadd.f32 %v215, %v217
    %v219 = vstv %s56
    %v220 = vmul.f32 %v186, %v219
    %v221 = vadd.f32 %v218, %v220
    %v222 = vstv %s61
    %v223 = vmul.f32 %v191, %v222
    %v224 = vadd.f32 %v221, %v223
    %v225 = vstv %s66
    %v226 = vmul.f32 %v196, %v225
    %v227 = vadd.f32 %v224, %v226
    %v228 = vstv %s71
    %v229 = vadd.f32 %v227, %v228
    %v230 = vtanh.pop %v229
    %v231 = vstv %s47
    %v232 = vmul.f32 %v176, %v231
    %v233 = vstv %s52
    %v234 = vmul.f32 %v181, %v233
    %v235 = vadd.f32 %v232, %v234
    %v236 = vstv %s57
    %v237 = vmul.f32 %v186, %v236
    %v238 = vadd.f32 %v235, %v237
    %v239 = vstv %s62
    %v240 = vmul.f32 %v191, %v239
    %v241 = vadd.f32 %v238, %v240
    %v242 = vstv %s67
    %v243 = vmul.f32 %v196, %v242
    %v244 = vadd.f32 %v241, %v243
    %v245 = vstv %s72
    %v246 = vadd.f32 %v244, %v245
    %v247 = vtanh.pop %v246
    %v248 = vstv %s48
    %v249 = vmul.f32 %v176, %v248
    %v250 = vstv %s53
    %v251 = vmul.f32 %v181, %v250
    %v252 = vadd.f32 %v249, %v251
    %v253 = vstv %s58
    %v254 = vmul.f32 %v186, %v253
    %v255 = vadd.f32 %v252, %v254
    %v256 = vstv %s63
    %v257 = vmul.f32 %v191, %v256
    %v258 = vadd.f32 %v255, %v257
    %v259 = vstv %s68
    %v260 = vmul.f32 %v196, %v259
    %v261 = vadd.f32 %v258, %v260
    %v262 = vstv %s73
    %v263 = vadd.f32 %v261, %v262
    %v264 = vtanh.pop %v263
    %v265 = vstv %s49
    %v266 = vmul.f32 %v176, %v265
    %v267 = vstv %s54
    %v268 = vmul.f32 %v181, %v267
    %v269 = vadd.f32 %v266, %v268
    %v270 = vstv %s59
    %v271 = vmul.f32 %v186, %v270
    %v272 = vadd.f32 %v269, %v271
    %v273 = vstv %s64
    %v274 = vmul.f32 %v191, %v273
    %v275 = vadd.f32 %v272, %v274
    %v276 = vstv %s69
    %v277 = vmul.f32 %v196, %v276
    %v278 = vadd.f32 %v275, %v277
    %v279 = vstv %s74
    %v280 = vadd.f32 %v278, %v279
    %v281 = vtanh.pop %v280
    %v282 = vstv %s75
    %v283 = vmul.f32 %v213, %v282
    %v284 = vstv %s80
    %v285 = vmul.f32 %v230, %v284
    %v286 = vadd.f32 %v283, %v285
    %v287 = vstv %s85
    %v288 = vmul.f32 %v247, %v287
    %v289 = vadd.f32 %v286, %v288
    %v290 = vstv %s90
    %v291 = vmul.f32 %v264, %v290
    %v292 = vadd.f32 %v289, %v291
    %v293 = vstv %s95
    %v294 = vmul.f32 %v281, %v293
    %v295 = vadd.f32 %v292, %v294
    %v296 = vstv %s100
    %v297 = vadd.f32 %v295, %v296
    %v298 = vtanh.pop %v297
    %v299 = vstv %s76
    %v300 = vmul.f32 %v213, %v299
    %v301 = vstv %s81
    %v302 = vmul.f32 %v230, %v301
    %v303 = vadd.f32 %v300, %v302
    %v304 = vstv %s86
    %v305 = vmul.f32 %v247, %v304
    %v306 = vadd.f32 %v303, %v305
    %v307 = vstv %s91
    %v308 = vmul.f32 %v264, %v307
    %v309 = vadd.f32 %v306, %v308
    %v310 = vstv %s96
    %v311 = vmul.f32 %v281, %v310
    %v312 = vadd.f32 %v309, %v311
    %v313 = vstv %s101
    %v314 = vadd.f32 %v312, %v313
    %v315 = vtanh.pop %v314
    %v316 = vstv %s77
    %v317 = vmul.f32 %v213, %v316
    %v318 = vstv %s82
    %v319 = vmul.f32 %v230, %v318
    %v320 = vadd.f32 %v317, %v319
    %v321 = vstv %s87
    %v322 = vmul.f32 %v247, %v321
    %v323 = vadd.f32 %v320, %v322
    %v324 = vstv %s92
    %v325 = vmul.f32 %v264, %v324
    %v326 = vadd.f32 %v323, %v325
    %v327 = vstv %s97
    %v328 = vmul.f32 %v281, %v327
    %v329 = vadd.f32 %v326, %v328
    %v330 = vstv %s102
    %v331 = vadd.f32 %v329, %v330
    %v332 = vtanh.pop %v331
    %v333 = vstv %s78
    %v334 = vmul.f32 %v213, %v333
    %v335 = vstv %s83
    %v336 = vmul.f32 %v230, %v335
    %v337 = vadd.f32 %v334, %v336
    %v338 = vstv %s88
    %v339 = vmul.f32 %v247, %v338
    %v340 = vadd.f32 %v337, %v339
    %v341 = vstv %s93
    %v342 = vmul.f32 %v264, %v341
    %v343 = vadd.f32 %v340, %v342
    %v344 = vstv %s98
    %v345 = vmul.f32 %v281, %v344
    %v346 = vadd.f32 %v343, %v345
    %v347 = vstv %s103
    %v348 = vadd.f32 %v346, %v347
    %v349 = vtanh.pop %v348
    %v350 = vstv %s79
    %v351 = vmul.f32 %v213, %v350
    %v352 = vstv %s84
    %v353 = vmul.f32 %v230, %v352
    %v354 = vadd.f32 %v351, %v353
    %v355 = vstv %s89
    %v356 = vmul.f32 %v247, %v355
    %v357 = vadd.f32 %v354, %v356
    %v358 = vstv %s94
    %v359 = vmul.f32 %v264, %v358
    %v360 = vadd.f32 %v357, %v359
    %v361 = vstv %s99
    %v362 = vmul.f32 %v281, %v361
    %v363 = vadd.f32 %v360, %v362
    %v364 = vstv %s104
    %v365 = vadd.f32 %v363, %v364
    %v366 = vtanh.pop %v365
    %v367 = vstv %s105
    %v368 = vmul.f32 %v298, %v367
    %v369 = vstv %s110
    %v370 = vmul.f32 %v315, %v369
    %v371 = vadd.f32 %v368, %v370
    %v372 = vstv %s115
    %v373 = vmul.f32 %v332, %v372
    %v374 = vadd.f32 %v371, %v373
    %v375 = vstv %s120
    %v376 = vmul.f32 %v349, %v375
    %v377 = vadd.f32 %v374, %v376
    %v378 = vstv %s125
    %v379 = vmul.f32 %v366, %v378
    %v380 = vadd.f32 %v377, %v379
    %v381 = vstv %s130
    %v382 = vadd.f32 %v380, %v381
    %v383 = vtanh.pop %v382
    %v384 = vstv %s106
    %v385 = vmul.f32 %v298, %v384
    %v386 = vstv %s111
    %v387 = vmul.f32 %v315, %v386
    %v388 = vadd.f32 %v385, %v387
    %v389 = vstv %s116
    %v390 = vmul.f32 %v332, %v389
    %v391 = vadd.f32 %v388, %v390
    %v392 = vstv %s121
    %v393 = vmul.f32 %v349, %v392
    %v394 = vadd.f32 %v391, %v393
    %v395 = vstv %s126
    %v396 = vmul.f32 %v366, %v395
    %v397 = vadd.f32 %v394, %v396
    %v398 = vstv %s131
    %v399 = vadd.f32 %v397, %v398
    %v400 = vtanh.pop %v399
    %v401 = vstv %s107
    %v402 = vmul.f32 %v298, %v401
    %v403 = vstv %s112
    %v404 = vmul.f32 %v315, %v403
    %v405 = vadd.f32 %v402, %v404
    %v406 = vstv %s117
    %v407 = vmul.f32 %v332, %v406
    %v408 = vadd.f32 %v405, %v407
    %v409 = vstv %s122
    %v410 = vmul.f32 %v349, %v409
    %v411 = vadd.f32 %v408, %v410
    %v412 = vstv %s127
    %v413 = vmul.f32 %v366, %v412
    %v414 = vadd.f32 %v411, %v413
    %v415 = vstv %s132
    %v416 = vadd.f32 %v414, %v415
    %v417 = vtanh.pop %v416
    %v418 = vstv %s108
    %v419 = vmul.f32 %v298, %v418
    %v420 = vstv %s113
    %v421 = vmul.f32 %v315, %v420
    %v422 = vadd.f32 %v419, %v421
    %v423 = vstv %s118
    %v424 = vmul.f32 %v332, %v423
    %v425 = vadd.f32 %v422, %v424
    %v426 = vstv %s123
    %v427 = vmul.f32 %v349, %v426
    %v428 = vadd.f32 %v425, %v427
    %v429 = vstv %s128
    %v430 = vmul.f32 %v366, %v429
    %v431 = vadd.f32 %v428, %v430
    %v432 = vstv %s133
    %v433 = vadd.f32 %v431, %v432
    %v434 = vtanh.pop %v433
    %v435 = vstv %s109
    %v436 = vmul.f32 %v298, %v435
    %v437 = vstv %s114
    %v438 = vmul.f32 %v315, %v437
    %v439 = vadd.f32 %v436, %v438
    %v440 = vstv %s119
    %v441 = vmul.f32 %v332, %v440
    %v442 = vadd.f32 %v439, %v441
    %v443 = vstv %s124
    %v444 = vmul.f32 %v349, %v443
    %v445 = vadd.f32 %v442, %v444
    %v446 = vstv %s129
    %v447 = vmul.f32 %v366, %v446
    %v448 = vadd.f32 %v445, %v447
    %v449 = vstv %s134
    %v450 = vadd.f32 %v448, %v449
    %v451 = vtanh.pop %v450
    %v452 = vstv %s135
    %v453 = vmul.f32 %v383, %v452
    %v454 = vstv %s140
    %v455 = vmul.f32 %v400, %v454
    %v456 = vadd.f32 %v453, %v455
    %v457 = vstv %s145
    %v458 = vmul.f32 %v417, %v457
    %v459 = vadd.f32 %v456, %v458
    %v460 = vstv %s150
    %v461 = vmul.f32 %v434, %v460
    %v462 = vadd.f32 %v459, %v461
    %v463 = vstv %s155
    %v464 = vmul.f32 %v451, %v463
    %v465 = vadd.f32 %v462, %v464
    %v466 = vstv %s160
    %v467 = vadd.f32 %v465, %v466
    %v468 = vtanh.pop %v467
    %v469 = vstv %s136
    %v470 = vmul.f32 %v383, %v469
    %v471 = vstv %s141
    %v472 = vmul.f32 %v400, %v471
    %v473 = vadd.f32 %v470, %v472
    %v474 = vstv %s146
    %v475 = vmul.f32 %v417, %v474
    %v476 = vadd.f32 %v473, %v475
    %v477 = vstv %s151
    %v478 = vmul.f32 %v434, %v477
    %v479 = vadd.f32 %v476, %v478
    %v480 = vstv %s156
    %v481 = vmul.f32 %v451, %v480
    %v482 = vadd.f32 %v479, %v481
    %v483 = vstv %s161
    %v484 = vadd.f32 %v482, %v483
    %v485 = vtanh.pop %v484
    %v486 = vstv %s137
    %v487 = vmul.f32 %v383, %v486
    %v488 = vstv %s142
    %v489 = vmul.f32 %v400, %v488
    %v490 = vadd.f32 %v487, %v489
    %v491 = vstv %s147
    %v492 = vmul.f32 %v417, %v491
    %v493 = vadd.f32 %v490, %v492
    %v494 = vstv %s152
    %v495 = vmul.f32 %v434, %v494
    %v496 = vadd.f32 %v493, %v495
    %v497 = vstv %s157
    %v498 = vmul.f32 %v451, %v497
    %v499 = vadd.f32 %v496, %v498
    %v500 = vstv %s162
    %v501 = vadd.f32 %v499, %v500
    %v502 = vtanh.pop %v501
    %v503 = vstv %s138
    %v504 = vmul.f32 %v383, %v503
    %v505 = vstv %s143
    %v506 = vmul.f32 %v400, %v505
    %v507 = vadd.f32 %v504, %v506
    %v508 = vstv %s148
    %v509 = vmul.f32 %v417, %v508
    %v510 = vadd.f32 %v507, %v509
    %v511 = vstv %s153
    %v512 = vmul.f32 %v434, %v511
    %v513 = vadd.f32 %v510, %v512
    %v514 = vstv %s158
    %v515 = vmul.f32 %v451, %v514
    %v516 = vadd.f32 %v513, %v515
    %v517 = vstv %s163
    %v518 = vadd.f32 %v516, %v517
    %v519 = vtanh.pop %v518
    %v520 = vstv %s139
    %v521 = vmul.f32 %v383, %v520
    %v522 = vstv %s144
    %v523 = vmul.f32 %v400, %v522
    %v524 = vadd.f32 %v521, %v523
    %v525 = vstv %s149
    %v526 = vmul.f32 %v417, %v525
    %v527 = vadd.f32 %v524, %v526
    %v528 = vstv %s154
    %v529 = vmul.f32 %v434, %v528
    %v530 = vadd.f32 %v527, %v529
    %v531 = vstv %s159
    %v532 = vmul.f32 %v451, %v531
    %v533 = vadd.f32 %v530, %v532
    %v534 = vstv %s164
    %v535 = vadd.f32 %v533, %v534
    %v536 = vtanh.pop %v535
    %v537 = vstv %s165
    %v538 = vmul.f32 %v468, %v537
    %v539 = vstv %s166
    %v540 = vmul.f32 %v485, %v539
    %v541 = vadd.f32 %v538, %v540
    %v542 = vstv %s167
    %v543 = vmul.f32 %v502, %v542
    %v544 = vadd.f32 %v541, %v543
    %v545 = vstv %s168
    %v546 = vmul.f32 %v519, %v545
    %v547 = vadd.f32 %v544, %v546
    %v548 = vstv %s169
    %v549 = vmul.f32 %v536, %v548
    %v550 = vadd.f32 %v547, %v549
    %v551 = vstv %s170
    %v552 = vadd.f32 %v550, %v551
    %553 = vst [vmem:[#allocation7] sm:$0xff] %v552
    // Predicated region
    $region18: #{tpu_custom_call.1} parent=1 // pred_check
      _
    $region19: #{tpu_custom_call.1} parent=1 // pred_check_branch
      %555 = sbr.rel (0) target = $region21
    $region20: #{tpu_custom_call.1} parent=1 // pred_region
      %s557 = ssub.s32 128, 128
      %558 = vsyncadd [#allocation4], %s557
      %s560 = sshll.u32 [#allocation7], 4
      %s561 = int_to_ptr.vmem [resolvable:$true] %s560
      %563 = dma.vmem_to_hbm [thread:$0]  %s561, 128, %s2, [#allocation4]
    $region21: #{tpu_custom_call.1} parent=1 // pred_fallthru
      _
    // Predicated region
    $region22: #{tpu_custom_call.1} parent=1 // pred_check
      _
    $region23: #{tpu_custom_call.1} parent=1 // pred_check_branch
      %565 = sbr.rel (0) target = $region25
    $region24: #{tpu_custom_call.1} parent=1 // pred_region
      %566 = dma.done [#allocation4], 128
    $region25: #{tpu_custom_call.1} parent=1 // pred_fallthru
      _
    %567 = vsyncpa [#allocation3], 1
    %568 = vsyncpa [#allocation4], 1
    %569 = vsyncpa [#allocation5], 1

</llo_original>
